<compile_context>
chip_gen: v5e
topology: v5e:2x2
jax: 0.10.0
libtpu: 0.0.40
codegen_flags: <defaults>
</compile_context>

<pallas_src>
import math
import functools

import jax
import jax.numpy as jnp
from jax.experimental import pallas as pl
from jax.experimental.pallas import tpu as pltpu


def build_pe(max_len: int, d_model: int) -> jnp.ndarray:
    """Sinusoidal positional-encoding buffer, shape (max_len, 1, d_model)."""
    position = jnp.arange(max_len, dtype=jnp.float32)[:, None]                 # (L, 1)
    div_term = jnp.exp(jnp.arange(0, d_model, 2, dtype=jnp.float32)
                       * (-math.log(10000.0) / d_model))                       # (D/2,)
    ang = position * div_term                                                  # (L, D/2)
    pe = jnp.zeros((max_len, d_model), dtype=jnp.float32)
    pe = pe.at[:, 0::2].set(jnp.sin(ang))
    pe = pe.at[:, 1::2].set(jnp.cos(ang))
    return pe[:, None, :]                                                      # (L, 1, D)


# ---------------------------------------------------------------------------
# Kernels. Blocks:
#   x_ref / o_ref : (tile_s, B*D)   -- lane-dense rows (col = b*D + d)
#   pe_ref        : (tile_s, D)     -- small PE stream, broadcast over batch
#                                      via B static column-chunk adds.
# ---------------------------------------------------------------------------
def _pe_eval_kernel(x_ref, pe_ref, o_ref, *, scale, batch, d_model):
    pe = pe_ref[...].astype(jnp.float32)
    s = jnp.float32(scale)
    for b in range(batch):                       # static unroll over batch chunks
        lo, hi = b * d_model, (b + 1) * d_model
        val = x_ref[:, lo:hi].astype(jnp.float32) * s + pe
        o_ref[:, lo:hi] = val.astype(o_ref.dtype)


def _pe_train_kernel(seed_ref, x_ref, pe_ref, o_ref, *, scale, batch, d_model,
                     keep_threshold_u32, inv_keep):
    # One seed per grid step; the stateful PRNG advances across batch chunks.
    pltpu.prng_seed(seed_ref[0], pl.program_id(0))
    pe = pe_ref[...].astype(jnp.float32)
    s = jnp.float32(scale)
    ik = jnp.float32(inv_keep)
    thr = jnp.uint32(keep_threshold_u32)
    for b in range(batch):
        lo, hi = b * d_model, (b + 1) * d_model
        val = x_ref[:, lo:hi].astype(jnp.float32) * s + pe
        bits = pltpu.prng_random_bits(val.shape)
        if bits.dtype != jnp.uint32:
            bits = pltpu.bitcast(bits, jnp.uint32)
        keep = bits >= thr                        # P(keep) = 1 - dropout_p
        o_ref[:, lo:hi] = jnp.where(keep, val * ik, 0.0).astype(o_ref.dtype)


# ---------------------------------------------------------------------------
# Wrapper
# ---------------------------------------------------------------------------
def _pick_tile_s(S, row_bytes, target_bytes=2 * 1024 * 1024):
    """Rows per grid step: ~2 MiB per x tile, 8-row aligned when tiling."""
    tile_s = min(S, max(1, target_bytes // max(row_bytes, 1)))
    if tile_s < S:
        tile_s = max(8, tile_s - (tile_s % 8))    # sublane-aligned second-to-last dim
        tile_s = min(tile_s, S)
    return int(tile_s)


def positional_encoding(x, pe, *, d_model, dropout_p=0.1, training=False,
                        seed=0, tile_s=None):
    """x: (S, B, D); pe: (max_len, 1, D). Returns (S, B, D) in x.dtype.

    Note: fold a per-call / per-layer offset into `seed` so repeated calls do
    not reuse the same dropout stream.
    """
    S, B, D = x.shape
    assert pe.shape[0] >= S and pe.shape[-1] == D and D == d_model
    assert 0.0 <= dropout_p < 1.0
    scale = math.sqrt(d_model)

    # Lane-dense 2-D views (free reshapes, row-major contiguity preserved).
    x2 = x.reshape(S, B * D)
    pe2 = pe[:S, 0, :]                                   # (S, D)

    itemsize = jnp.dtype(x.dtype).itemsize
    if tile_s is None:
        tile_s = _pick_tile_s(S, B * D * itemsize)
    # TODO(synk): for extremely wide rows (B*D*itemsize >> 2 MiB) add a second
    # grid axis over columns so a single row block never exceeds v7x's VMEM.
    grid = (pl.cdiv(S, tile_s),)                          # ragged tail masked by Pallas

    compiler_params = pltpu.CompilerParams(
        dimension_semantics=("parallel",),                # distinct out block per step
        vmem_limit_bytes=32 * 1024 * 1024,                # safe on v5e/v6e/v7x
    )
    out_shape = jax.ShapeDtypeStruct((S, B * D), x.dtype)

    if training and dropout_p > 0.0:
        thr = min(int(round(dropout_p * 4294967296.0)), 4294967295)
        kernel = functools.partial(
            _pe_train_kernel, scale=scale, batch=B, d_model=D,
            keep_threshold_u32=thr, inv_keep=1.0 / (1.0 - dropout_p))
        grid_spec = pltpu.PrefetchScalarGridSpec(
            num_scalar_prefetch=1,
            grid=grid,
            in_specs=[pl.BlockSpec((tile_s, B * D), lambda i, seed_ref: (i, 0)),
                      pl.BlockSpec((tile_s, D), lambda i, seed_ref: (i, 0))],
            out_specs=pl.BlockSpec((tile_s, B * D), lambda i, seed_ref: (i, 0)),
        )
        seed_arr = jnp.asarray([seed], dtype=jnp.int32)
        out2 = pl.pallas_call(
            kernel, out_shape=out_shape, grid_spec=grid_spec,
            compiler_params=compiler_params,
        )(seed_arr, x2, pe2)
    else:
        # Eval path: no scalar prefetch (no unused SMEM DMA), no PRNG codegen.
        kernel = functools.partial(_pe_eval_kernel, scale=scale, batch=B, d_model=D)
        out2 = pl.pallas_call(
            kernel, out_shape=out_shape, grid=grid,
            in_specs=[pl.BlockSpec((tile_s, B * D), lambda i: (i, 0)),
                      pl.BlockSpec((tile_s, D), lambda i: (i, 0))],
            out_specs=pl.BlockSpec((tile_s, B * D), lambda i: (i, 0)),
            compiler_params=compiler_params,
        )(x2, pe2)

    return out2.reshape(S, B, D)


if __name__ == "__main__":
    # Small shapes implied by the forward: (seq_len, batch, d_model)
    SEQ, BATCH, D_MODEL, MAX_LEN = 8, 2, 32, 64

    key = jax.random.PRNGKey(0)
    x = jax.random.normal(key, (SEQ, BATCH, D_MODEL), dtype=jnp.float32)
    pe = build_pe(MAX_LEN, D_MODEL)

    # Eval-mode forward (dropout is identity in eval, matching module.eval()).
    out = positional_encoding(x, pe, d_model=D_MODEL, dropout_p=0.1,
                              training=False)
    out = jax.block_until_ready(out)

    # Pure-JAX reference for the deterministic part.
    ref = x * math.sqrt(D_MODEL) + pe[:SEQ]
    assert jnp.allclose(out, ref, atol=1e-5, rtol=1e-5), "mismatch vs reference"

    # Training (dropout) path uses the TPU hardware PRNG, which has no
    # CPU/interpret lowering -> only exercise it on a real TPU backend.
    # TODO(synk): PyTorch's dropout RNG stream is not reproducible on TPU; the
    # training path uses the TPU hardware PRNG (same distribution, different bits).
    if jax.default_backend() == "tpu":
        out_train = positional_encoding(x, pe, d_model=D_MODEL, dropout_p=0.1,
                                        training=True, seed=1234)
        out_train = jax.block_until_ready(out_train)
        keep_frac = float(jnp.mean((out_train != 0).astype(jnp.float32)))
        assert 0.5 < keep_frac <= 1.0, "dropout keep fraction implausible"

    print("KERNEL_OK")
</pallas_src>

<mosaic_0001>
module attributes {stable_mosaic.version = 11 : i64} {
  func.func @_pe_eval_kernel(%arg0: i32, %arg1: memref<8x64xf32, #tpu.memory_space<vmem>>, %arg2: memref<8x32xf32, #tpu.memory_space<vmem>>, %arg3: memref<8x64xf32, #tpu.memory_space<vmem>>) attributes {dimension_semantics = [#tpu.dimension_semantics<parallel>], iteration_bounds = array<i64: 1>, scalar_prefetch = 0 : i64, scratch_operands = 0 : i64, tpu.core_type = #tpu.core_type<tc>, window_params = [{transform_indices = @transform_0, window_bounds = array<i64: 8, 64>}, {transform_indices = @transform_1, window_bounds = array<i64: 8, 32>}, {transform_indices = @transform_2, window_bounds = array<i64: 8, 64>}]} {
    %c0 = arith.constant 0 : index
    %c0_0 = arith.constant 0 : index
    %0 = vector.load %arg2[%c0, %c0_0] : memref<8x32xf32, #tpu.memory_space<vmem>>, vector<8x32xf32>
    %c0_1 = arith.constant 0 : index
    %c0_2 = arith.constant 0 : index
    %1 = vector.load %arg1[%c0_1, %c0_2] : memref<8x64xf32, #tpu.memory_space<vmem>>, vector<8x32xf32>
    %cst = arith.constant 5.65685415 : f32
    %2 = vector.broadcast %cst : f32 to vector<8x32xf32>
    %3 = arith.mulf %1, %2 : vector<8x32xf32>
    %4 = arith.addf %3, %0 : vector<8x32xf32>
    %c0_3 = arith.constant 0 : index
    %c0_4 = arith.constant 0 : index
    %5 = vector.load %arg3[%c0_3, %c0_4] : memref<8x64xf32, #tpu.memory_space<vmem>>, vector<8x32xf32>
    tpu.vector_store %arg3[%c0_3, %c0_4], %4 {strides = array<i32>} : memref<8x64xf32, #tpu.memory_space<vmem>>, vector<8x32xf32>,
    %c0_5 = arith.constant 0 : index
    %c32 = arith.constant 32 : index
    %6 = vector.load %arg1[%c0_5, %c32] : memref<8x64xf32, #tpu.memory_space<vmem>>, vector<8x32xf32>
    %cst_6 = arith.constant 5.65685415 : f32
    %7 = vector.broadcast %cst_6 : f32 to vector<8x32xf32>
    %8 = arith.mulf %6, %7 : vector<8x32xf32>
    %9 = arith.addf %8, %0 : vector<8x32xf32>
    %c0_7 = arith.constant 0 : index
    %c32_8 = arith.constant 32 : index
    %10 = vector.load %arg3[%c0_7, %c32_8] : memref<8x64xf32, #tpu.memory_space<vmem>>, vector<8x32xf32>
    tpu.vector_store %arg3[%c0_7, %c32_8], %9 {strides = array<i32>} : memref<8x64xf32, #tpu.memory_space<vmem>>, vector<8x32xf32>,
    return
  }
  func.func @transform_0(%arg0: i32) -> (i32, i32) {
    %c0_i32 = arith.constant 0 : i32
    %c0_i32_0 = arith.constant 0 : i32
    return %arg0, %c0_i32 : i32, i32
  }
  func.func @transform_1(%arg0: i32) -> (i32, i32) {
    %c0_i32 = arith.constant 0 : i32
    %c0_i32_0 = arith.constant 0 : i32
    return %arg0, %c0_i32 : i32, i32
  }
  func.func @transform_2(%arg0: i32) -> (i32, i32) {
    %c0_i32 = arith.constant 0 : i32
    %c0_i32_0 = arith.constant 0 : i32
    return %arg0, %c0_i32 : i32, i32
  }
}

</mosaic_0001>

<llo_original>
// kernel: tpu_custom_call.1
$region0: #{tpu_custom_call.1}
  #allocation0 [shape = 'u32[]', space=smem, size = 0x4, offset = 0x4, fixed_abs, tag = 'smem constant byte address 0x4 - core index']
  #allocation1 [shape = 'u32[72,128]{1,0:T(1,128)}', space=vmem, size = 0x9000, scoped, tag = 'internal scratch']
  %s0 = inlined_call_operand.hbm [shape: f32[8,64], index: 0, kind: input, shape index: {}]
  %s1 = inlined_call_operand.hbm [shape: f32[8,32], index: 1, kind: input, shape index: {}]
  %s2 = inlined_call_operand.hbm [shape: f32[8,64], index: 2, kind: output, shape index: {}]
  %s3 = sld [smem:[#allocation0]]
  $region26: #{tpu_custom_call.1} parent=0
    _
  %s5 = ssub.s32 1, %s3
  %s6 = scalar_select 0, %s5, %s3
  $region1: #{tpu_custom_call.1} parent=0
    #allocation2 [shape = 'u8[4096]{0}', space=vmem, size = 0x1000, scoped, tag = 'input window, operand 0, single buffered']
    #allocation3 [shape = 's32[1]{0}', space=sflag, size = 0x4, scoped, tag = 'scoped memory for tpu_custom_call.1']
    #allocation4 [shape = 's32[1]{0}', space=sflag, size = 0x4, scoped, tag = 'scoped memory for tpu_custom_call.1']
    #allocation5 [shape = 'u8[4096]{0}', space=vmem, size = 0x1000, scoped, tag = 'input window, operand 1, single buffered']
    #allocation6 [shape = 's32[1]{0}', space=sflag, size = 0x4, scoped, tag = 'scoped memory for tpu_custom_call.1']
    #allocation7 [shape = 'u8[4096]{0}', space=vmem, size = 0x1000, scoped, tag = 'output window, operand 0, single buffered']
    %7 = vsyncpa [#allocation3], 0
    %8 = vsyncpa [#allocation6], 0
    %9 = vsyncpa [#allocation4], 0
    // Predicated region
    $region2: #{tpu_custom_call.1} parent=1 // pred_check
      _
    $region3: #{tpu_custom_call.1} parent=1 // pred_check_branch
      %11 = sbr.rel (0) target = $region5
    $region4: #{tpu_custom_call.1} parent=1 // pred_region
      %13 = vsyncadd [#allocation3], 0
      %s15 = sshll.u32 %s0, 4
      %s16 = int_to_ptr.hbm [resolvable:$true] %s15
      %s17 = sshll.u32 [#allocation2], 4
      %s18 = int_to_ptr.vmem [resolvable:$true] %s17
      %20 = dma.hbm_to_vmem [thread:$0]  %s16, 128, %s18, [#allocation3]
    $region5: #{tpu_custom_call.1} parent=1 // pred_fallthru
      _
    // Predicated region
    $region6: #{tpu_custom_call.1} parent=1 // pred_check
      _
    $region7: #{tpu_custom_call.1} parent=1 // pred_check_branch
      %22 = sbr.rel (0) target = $region9
    $region8: #{tpu_custom_call.1} parent=1 // pred_region
      %24 = vsyncadd [#allocation6], 0
      %s26 = sshll.u32 %s1, 4
      %s27 = int_to_ptr.hbm [resolvable:$true] %s26
      %s28 = sshll.u32 [#allocation5], 4
      %s29 = int_to_ptr.vmem [resolvable:$true] %s28
      %31 = dma.hbm_to_vmem [thread:$0]  %s27, 128, %s29, [#allocation6]
    $region9: #{tpu_custom_call.1} parent=1 // pred_fallthru
      _
    // Predicated region
    $region10: #{tpu_custom_call.1} parent=1 // pred_check
      _
    $region11: #{tpu_custom_call.1} parent=1 // pred_check_branch
      %33 = sbr.rel (0) target = $region13
    $region12: #{tpu_custom_call.1} parent=1 // pred_region
      %35 = dma.done [#allocation3], 128
    $region13: #{tpu_custom_call.1} parent=1 // pred_fallthru
      _
    // Predicated region
    $region14: #{tpu_custom_call.1} parent=1 // pred_check
      _
    $region15: #{tpu_custom_call.1} parent=1 // pred_check_branch
      %37 = sbr.rel (0) target = $region17
    $region16: #{tpu_custom_call.1} parent=1 // pred_region
      %39 = dma.done [#allocation6], 128
    $region17: #{tpu_custom_call.1} parent=1 // pred_fallthru
      _
    %v40 = vld [vmem:[#allocation5] sm:$0xff]
    %v41 = vld [vmem:[#allocation2] sm:$0xff]
    %v42 = vmul.f32 %v41, 5.656854
    %v43 = vadd.f32 %v42, %v40
    %vm44 = vcmask 261120
    %45 = vst.msk [vmem:[#allocation7] sm:$0xff] %vm44, %v43
    %v46 = vld [vmem:[#allocation2] sm:$0xff]
    %v47 = vmul.f32 %v46, 5.656854
    %49 = vrot.lane.b32.xlu0 %v40, 32
    %v50 = vpop.permute.xlu0 %49
    %v52 = vadd.f32 %v47, %v50
    %vm53 = vcmask 523520
    %54 = vst.msk [vmem:[#allocation7] sm:$0xff] %vm53, %v52
    // Predicated region
    $region18: #{tpu_custom_call.1} parent=1 // pred_check
      _
    $region19: #{tpu_custom_call.1} parent=1 // pred_check_branch
      %56 = sbr.rel (0) target = $region21
    $region20: #{tpu_custom_call.1} parent=1 // pred_region
      %58 = vsyncadd [#allocation4], 0
      %s60 = sshll.u32 [#allocation7], 4
      %s61 = int_to_ptr.vmem [resolvable:$true] %s60
      %s62 = sshll.u32 %s2, 4
      %s63 = int_to_ptr.hbm [resolvable:$true] %s62
      %65 = dma.vmem_to_hbm [thread:$0]  %s61, 128, %s63, [#allocation4]
    $region21: #{tpu_custom_call.1} parent=1 // pred_fallthru
      _
    // Predicated region
    $region22: #{tpu_custom_call.1} parent=1 // pred_check
      _
    $region23: #{tpu_custom_call.1} parent=1 // pred_check_branch
      %67 = sbr.rel (0) target = $region25
    $region24: #{tpu_custom_call.1} parent=1 // pred_region
      %69 = dma.done [#allocation4], 128
    $region25: #{tpu_custom_call.1} parent=1 // pred_fallthru
      _
    %70 = vsyncpa [#allocation3], 1
    %71 = vsyncpa [#allocation6], 1
    %72 = vsyncpa [#allocation4], 1

</llo_original>
